<compile_context>
chip_gen: v7x
topology: tpu7x:2x2x1
jax: 0.10.0
libtpu: 0.0.40
codegen_flags: <defaults>
</compile_context>

<pallas_src>
import jax
import jax.numpy as jnp
from jax.experimental import pallas as pl
from jax.experimental.pallas import tpu as pltpu

NEG_SLOPE = 0.01   # nn.LeakyReLU default
LN_EPS = 1e-5      # nn.LayerNorm default


def _leaky_relu(x):
    # max(x, a*x) == LeakyReLU for 0 < a < 1 (mul + max, no select).
    return jnp.maximum(x, NEG_SLOPE * x)


def residual_block_kernel(x_ref, w1_ref, b1_ref, w2_ref, b2_ref,
                          gamma_ref, beta_ref, o_ref):
    # Single load of the streamed tile; fp32 copy kept for residual / LayerNorm.
    x_in = x_ref[...]
    x_f32 = x_in.astype(jnp.float32)
    xm = x_in if x_in.dtype == w1_ref.dtype else x_in.astype(w1_ref.dtype)

    # Linear(F, 2F): matmul-dtype operands, fp32 MXU accumulation.
    h = jnp.dot(xm, w1_ref[...], preferred_element_type=jnp.float32)
    h = _leaky_relu(h + b1_ref[...])

    # Dropout(0.2) -> identity in inference mode.
    # TODO(synk): training-mode dropout via pltpu.prng_seed + pltpu.prng_random_bits.

    # Linear(2F, F), same scheme.
    out = jnp.dot(h.astype(w2_ref.dtype), w2_ref[...],
                  preferred_element_type=jnp.float32)
    out = out + b2_ref[...] + x_f32            # bias + residual (fp32)

    # LayerNorm over the feature (lane) dim, fp32 throughout.
    mean = jnp.mean(out, axis=-1, keepdims=True)
    cent = out - mean
    var = jnp.mean(cent * cent, axis=-1, keepdims=True)
    norm = cent * jax.lax.rsqrt(var + LN_EPS)
    norm = norm * gamma_ref[...] + beta_ref[...]

    # Final LeakyReLU, cast back to the streamed activation dtype.
    o_ref[...] = _leaky_relu(norm).astype(o_ref.dtype)


def _round_up(n, m):
    return ((n + m - 1) // m) * m


def _vmem_capacity_bytes():
    try:
        return int(pltpu.get_tpu_info().vmem_capacity_bytes)
    except Exception:
        return 64 << 20   # conservative (v7x-sized) fallback


def residual_block(x, w1, b1, w2, b2, gamma, beta, *,
                   block_b=512, matmul_dtype=jnp.bfloat16):
    """Fused ResidualBlock forward.

    x: (B, F); w1: (F, 2F); b1: (2F,); w2: (2F, F); b2: (F,); gamma/beta: (F,)
    Output dtype == x.dtype (pass bf16 activations for bf16 I/O, no extra HBM pass).
    For best MXU/lane utilization, F should be a multiple of 128 in production;
    arbitrary F is still handled correctly (block = full feature extent).
    """
    B, F = x.shape
    F2 = 2 * F

    # ---- batch tile selection -------------------------------------------------
    if B <= 8:
        TB = B                                   # single full-extent tile
    else:
        # Target >= 2 grid steps (feeds both TensorCores on v7x), sublane-aligned,
        # capped at block_b and never larger than the (rounded-up) batch.
        TB = min(block_b, _round_up(pl.cdiv(B, 2), 8))
        TB = max(8, min(TB, _round_up(B, 8)))

    # ---- generation-aware VMEM budget -----------------------------------------
    vmem_cap = _vmem_capacity_bytes()
    budget_cap = (100 << 20) if vmem_cap >= (96 << 20) else (48 << 20)

    w_itemsize = jnp.dtype(matmul_dtype).itemsize
    x_itemsize = jnp.dtype(x.dtype).itemsize
    # single-buffered resident weights + (padded) bias/gamma/beta vectors
    resident_bytes = 2 * F * F2 * w_itemsize + 4 * _round_up(F2, 128) * 8 * 4

    def _needed(tb):
        stream = 2 * tb * F * x_itemsize * 2                # double-buffered x + out tiles
        interm = 4 * tb * F * 4 + 2 * tb * F2 * 4           # fp32 x_f32/out/cent/norm + h
        return resident_bytes + stream + interm

    while _needed(TB) > budget_cap and TB > 8:
        TB = max(8, _round_up(TB // 2, 8))
    # TODO(synk): if resident_bytes alone exceeds budget_cap (very large F), switch to the
    #             K/N-tiled weight path instead of relying on the vmem limit.

    grid = (pl.cdiv(B, TB),)
    vmem_limit = int(min(max(int(_needed(TB) * 1.25) + (4 << 20), 16 << 20), budget_cap))

    # ---- parameters: weights in matmul dtype, small vectors fp32 (1, N) --------
    w1m = w1.astype(matmul_dtype)
    w2m = w2.astype(matmul_dtype)
    b1_2d = b1.reshape(1, F2).astype(jnp.float32)
    b2_2d = b2.reshape(1, F).astype(jnp.float32)
    gamma_2d = gamma.reshape(1, F).astype(jnp.float32)
    beta_2d = beta.reshape(1, F).astype(jnp.float32)

    streamed = pl.BlockSpec((TB, F), lambda i: (i, 0))

    cost = pl.CostEstimate(
        flops=int(2 * B * F * F2 * 2 + 12 * B * F),
        transcendentals=int(B),                  # one rsqrt per row
        bytes_accessed=int(2 * B * F * x_itemsize
                           + 2 * F * F2 * w_itemsize
                           + (F2 + 3 * F) * 4),
    )

    def _call(single_buffer_resident):
        if single_buffer_resident:
            # Constant index_map -> single-buffer the resident operands (halves weight VMEM).
            def resident(shape):
                return pl.BlockSpec(shape, lambda i: (0, 0),
                                    pipeline_mode=pl.Buffered(1))
        else:
            def resident(shape):
                return pl.BlockSpec(shape, lambda i: (0, 0))

        return pl.pallas_call(
            residual_block_kernel,
            out_shape=jax.ShapeDtypeStruct((B, F), x.dtype),
            grid=grid,
            in_specs=[
                streamed,               # x (streamed over batch)
                resident((F, F2)),      # w1
                resident((1, F2)),      # b1
                resident((F2, F)),      # w2
                resident((1, F)),       # b2
                resident((1, F)),       # gamma
                resident((1, F)),       # beta
            ],
            out_specs=streamed,
            compiler_params=pltpu.CompilerParams(
                dimension_semantics=("parallel",),   # megacore sharding on v7x
                vmem_limit_bytes=vmem_limit,
            ),
            cost_estimate=cost,
        )(x, w1m, b1_2d, w2m, b2_2d, gamma_2d, beta_2d)

    try:
        return _call(True)
    except Exception:
        # Fallback: this JAX/Mosaic build rejects pipeline_mode=Buffered(1); use defaults.
        return _call(False)


def residual_block_ref(x, w1, b1, w2, b2, gamma, beta):
    # Pure-JAX fp32 reference for correctness checks.
    h = _leaky_relu(x @ w1 + b1)
    out = h @ w2 + b2 + x
    mean = jnp.mean(out, axis=-1, keepdims=True)
    var = jnp.mean((out - mean) ** 2, axis=-1, keepdims=True)
    norm = (out - mean) * jax.lax.rsqrt(var + LN_EPS)
    return _leaky_relu(norm * gamma + beta)


if __name__ == "__main__":
    # Small demo shapes (production perf needs B*F large, F multiple of 128 — see notes;
    # semantics are identical at any shape).
    B, F = 8, 32
    key = jax.random.PRNGKey(0)
    kx, kw1, kb1, kw2, kb2 = jax.random.split(key, 5)

    x = jax.random.normal(kx, (B, F), dtype=jnp.float32)

    # Deterministic synthetic parameters (shapes match the module's __init__).
    lim1 = 1.0 / jnp.sqrt(F)
    w1 = jax.random.uniform(kw1, (F, 2 * F), minval=-lim1, maxval=lim1, dtype=jnp.float32)
    b1 = jax.random.uniform(kb1, (2 * F,), minval=-lim1, maxval=lim1, dtype=jnp.float32)
    lim2 = 1.0 / jnp.sqrt(2 * F)
    w2 = jax.random.uniform(kw2, (2 * F, F), minval=-lim2, maxval=lim2, dtype=jnp.float32)
    b2 = jax.random.uniform(kb2, (F,), minval=-lim2, maxval=lim2, dtype=jnp.float32)
    gamma = jnp.ones((F,), dtype=jnp.float32)
    beta = jnp.zeros((F,), dtype=jnp.float32)

    ref = residual_block_ref(x, w1, b1, w2, b2, gamma, beta)

    # 1) fp32 matmul path: tight check against the fp32 reference.
    out_f32 = residual_block(x, w1, b1, w2, b2, gamma, beta, matmul_dtype=jnp.float32)
    out_f32 = jax.block_until_ready(out_f32)
    assert out_f32.shape == (B, F)
    assert jnp.allclose(out_f32, ref, atol=1e-5, rtol=1e-5), \
        f"fp32 path max abs err {jnp.max(jnp.abs(out_f32 - ref))}"

    # 2) default bf16-matmul / fp32-accumulate path (fp32 activations in/out).
    out_bf16 = residual_block(x, w1, b1, w2, b2, gamma, beta)
    out_bf16 = jax.block_until_ready(out_bf16)
    assert out_bf16.shape == (B, F)
    assert jnp.allclose(out_bf16, ref, atol=3e-2, rtol=3e-2), \
        f"bf16-matmul path max abs err {jnp.max(jnp.abs(out_bf16 - ref))}"

    # 3) bf16 activation I/O path (bf16 in -> bf16 out, halves streamed HBM bytes).
    out_act_bf16 = residual_block(x.astype(jnp.bfloat16), w1, b1, w2, b2, gamma, beta)
    out_act_bf16 = jax.block_until_ready(out_act_bf16)
    assert out_act_bf16.dtype == jnp.bfloat16 and out_act_bf16.shape == (B, F)
    assert jnp.allclose(out_act_bf16.astype(jnp.float32), ref, atol=8e-2, rtol=8e-2), \
        f"bf16 I/O path max abs err {jnp.max(jnp.abs(out_act_bf16.astype(jnp.float32) - ref))}"

    print("KERNEL_OK")
</pallas_src>

<mosaic_0001>
module attributes {stable_mosaic.version = 11 : i64} {
  func.func @residual_block_kernel(%arg0: i32, %arg1: memref<8x32xf32, #tpu.memory_space<vmem>>, %arg2: memref<32x64xf32, #tpu.memory_space<vmem>>, %arg3: memref<1x64xf32, #tpu.memory_space<vmem>>, %arg4: memref<64x32xf32, #tpu.memory_space<vmem>>, %arg5: memref<1x32xf32, #tpu.memory_space<vmem>>, %arg6: memref<1x32xf32, #tpu.memory_space<vmem>>, %arg7: memref<1x32xf32, #tpu.memory_space<vmem>>, %arg8: memref<8x32xf32, #tpu.memory_space<vmem>>) attributes {dimension_semantics = [#tpu.dimension_semantics<parallel>], iteration_bounds = array<i64: 1>, scalar_prefetch = 0 : i64, scratch_operands = 0 : i64, tpu.core_type = #tpu.core_type<tc>, window_params = [{transform_indices = @transform_0, window_bounds = array<i64: 8, 32>}, {pipeline_mode = #tpu.pipeline_mode<synchronous>, transform_indices = @transform_1, window_bounds = array<i64: 32, 64>}, {pipeline_mode = #tpu.pipeline_mode<synchronous>, transform_indices = @transform_2, window_bounds = array<i64: 1, 64>}, {pipeline_mode = #tpu.pipeline_mode<synchronous>, transform_indices = @transform_3, window_bounds = array<i64: 64, 32>}, {pipeline_mode = #tpu.pipeline_mode<synchronous>, transform_indices = @transform_4, window_bounds = array<i64: 1, 32>}, {pipeline_mode = #tpu.pipeline_mode<synchronous>, transform_indices = @transform_5, window_bounds = array<i64: 1, 32>}, {pipeline_mode = #tpu.pipeline_mode<synchronous>, transform_indices = @transform_6, window_bounds = array<i64: 1, 32>}, {transform_indices = @transform_7, window_bounds = array<i64: 8, 32>}]} {
    %c0 = arith.constant 0 : index
    %c0_0 = arith.constant 0 : index
    %0 = vector.load %arg1[%c0, %c0_0] : memref<8x32xf32, #tpu.memory_space<vmem>>, vector<8x32xf32>
    %c0_1 = arith.constant 0 : index
    %c0_2 = arith.constant 0 : index
    %1 = vector.load %arg2[%c0_1, %c0_2] : memref<32x64xf32, #tpu.memory_space<vmem>>, vector<32x64xf32>
    %cst = arith.constant dense<0.000000e+00> : vector<8x64xf32>
    %2 = tpu.matmul %0, %1, %cst {dimension_numbers = #tpu.dot_dimension_numbers<[1], [0], [0], [1], [0, 0, 1, 1], [], []>} : vector<8x32xf32>, vector<32x64xf32>, vector<8x64xf32> -> vector<8x64xf32>
    %c0_3 = arith.constant 0 : index
    %c0_4 = arith.constant 0 : index
    %3 = vector.load %arg3[%c0_3, %c0_4] : memref<1x64xf32, #tpu.memory_space<vmem>>, vector<1x64xf32>
    %4 = vector.broadcast %3 : vector<1x64xf32> to vector<8x64xf32>
    %5 = arith.addf %2, %4 : vector<8x64xf32>
    %cst_5 = arith.constant 0.00999999977 : f32
    %6 = vector.broadcast %cst_5 : f32 to vector<8x64xf32>
    %7 = arith.mulf %6, %5 : vector<8x64xf32>
    %8 = arith.maximumf %5, %7 : vector<8x64xf32>
    %c0_6 = arith.constant 0 : index
    %c0_7 = arith.constant 0 : index
    %9 = vector.load %arg4[%c0_6, %c0_7] : memref<64x32xf32, #tpu.memory_space<vmem>>, vector<64x32xf32>
    %cst_8 = arith.constant dense<0.000000e+00> : vector<8x32xf32>
    %10 = tpu.matmul %8, %9, %cst_8 {dimension_numbers = #tpu.dot_dimension_numbers<[1], [0], [0], [1], [0, 0, 1, 1], [], []>} : vector<8x64xf32>, vector<64x32xf32>, vector<8x32xf32> -> vector<8x32xf32>
    %c0_9 = arith.constant 0 : index
    %c0_10 = arith.constant 0 : index
    %11 = vector.load %arg5[%c0_9, %c0_10] : memref<1x32xf32, #tpu.memory_space<vmem>>, vector<1x32xf32>
    %12 = vector.broadcast %11 : vector<1x32xf32> to vector<8x32xf32>
    %13 = arith.addf %10, %12 : vector<8x32xf32>
    %14 = arith.addf %13, %0 : vector<8x32xf32>
    %cst_11 = arith.constant dense<0.000000e+00> : vector<8xf32>
    %15 = vector.multi_reduction <add>, %14, %cst_11 [1] : vector<8x32xf32> to vector<8xf32>
    %16 = vector.shape_cast %15 : vector<8xf32> to vector<8x1xf32>
    %cst_12 = arith.constant 3.200000e+01 : f32
    %17 = vector.broadcast %cst_12 : f32 to vector<8x1xf32>
    %18 = arith.divf %16, %17 : vector<8x1xf32>
    %19 = vector.broadcast %18 : vector<8x1xf32> to vector<8x32xf32>
    %20 = arith.subf %14, %19 : vector<8x32xf32>
    %21 = arith.mulf %20, %20 : vector<8x32xf32>
    %cst_13 = arith.constant dense<0.000000e+00> : vector<8xf32>
    %22 = vector.multi_reduction <add>, %21, %cst_13 [1] : vector<8x32xf32> to vector<8xf32>
    %23 = vector.shape_cast %22 : vector<8xf32> to vector<8x1xf32>
    %cst_14 = arith.constant 3.200000e+01 : f32
    %24 = vector.broadcast %cst_14 : f32 to vector<8x1xf32>
    %25 = arith.divf %23, %24 : vector<8x1xf32>
    %cst_15 = arith.constant 9.99999974E-6 : f32
    %26 = vector.broadcast %cst_15 : f32 to vector<8x1xf32>
    %27 = arith.addf %25, %26 : vector<8x1xf32>
    %28 = math.rsqrt %27 : vector<8x1xf32>
    %29 = vector.broadcast %28 : vector<8x1xf32> to vector<8x32xf32>
    %30 = arith.mulf %20, %29 : vector<8x32xf32>
    %c0_16 = arith.constant 0 : index
    %c0_17 = arith.constant 0 : index
    %31 = vector.load %arg6[%c0_16, %c0_17] : memref<1x32xf32, #tpu.memory_space<vmem>>, vector<1x32xf32>
    %32 = vector.broadcast %31 : vector<1x32xf32> to vector<8x32xf32>
    %33 = arith.mulf %30, %32 : vector<8x32xf32>
    %c0_18 = arith.constant 0 : index
    %c0_19 = arith.constant 0 : index
    %34 = vector.load %arg7[%c0_18, %c0_19] : memref<1x32xf32, #tpu.memory_space<vmem>>, vector<1x32xf32>
    %35 = vector.broadcast %34 : vector<1x32xf32> to vector<8x32xf32>
    %36 = arith.addf %33, %35 : vector<8x32xf32>
    %cst_20 = arith.constant 0.00999999977 : f32
    %37 = vector.broadcast %cst_20 : f32 to vector<8x32xf32>
    %38 = arith.mulf %37, %36 : vector<8x32xf32>
    %39 = arith.maximumf %36, %38 : vector<8x32xf32>
    %c0_21 = arith.constant 0 : index
    %c0_22 = arith.constant 0 : index
    %40 = vector.load %arg8[%c0_21, %c0_22] : memref<8x32xf32, #tpu.memory_space<vmem>>, vector<8x32xf32>
    tpu.vector_store %arg8[%c0_21, %c0_22], %39 {strides = array<i32>} : memref<8x32xf32, #tpu.memory_space<vmem>>, vector<8x32xf32>,
    return
  }
  func.func @transform_0(%arg0: i32) -> (i32, i32) {
    %c0_i32 = arith.constant 0 : i32
    %c0_i32_0 = arith.constant 0 : i32
    return %arg0, %c0_i32 : i32, i32
  }
  func.func @transform_1(%arg0: i32) -> (i32, i32) {
    %c0_i32 = arith.constant 0 : i32
    %c0_i32_0 = arith.constant 0 : i32
    %c0_i32_1 = arith.constant 0 : i32
    return %c0_i32, %c0_i32_0 : i32, i32
  }
  func.func @transform_2(%arg0: i32) -> (i32, i32) {
    %c0_i32 = arith.constant 0 : i32
    %c0_i32_0 = arith.constant 0 : i32
    %c0_i32_1 = arith.constant 0 : i32
    return %c0_i32, %c0_i32_0 : i32, i32
  }
  func.func @transform_3(%arg0: i32) -> (i32, i32) {
    %c0_i32 = arith.constant 0 : i32
    %c0_i32_0 = arith.constant 0 : i32
    %c0_i32_1 = arith.constant 0 : i32
    return %c0_i32, %c0_i32_0 : i32, i32
  }
  func.func @transform_4(%arg0: i32) -> (i32, i32) {
    %c0_i32 = arith.constant 0 : i32
    %c0_i32_0 = arith.constant 0 : i32
    %c0_i32_1 = arith.constant 0 : i32
    return %c0_i32, %c0_i32_0 : i32, i32
  }
  func.func @transform_5(%arg0: i32) -> (i32, i32) {
    %c0_i32 = arith.constant 0 : i32
    %c0_i32_0 = arith.constant 0 : i32
    %c0_i32_1 = arith.constant 0 : i32
    return %c0_i32, %c0_i32_0 : i32, i32
  }
  func.func @transform_6(%arg0: i32) -> (i32, i32) {
    %c0_i32 = arith.constant 0 : i32
    %c0_i32_0 = arith.constant 0 : i32
    %c0_i32_1 = arith.constant 0 : i32
    return %c0_i32, %c0_i32_0 : i32, i32
  }
  func.func @transform_7(%arg0: i32) -> (i32, i32) {
    %c0_i32 = arith.constant 0 : i32
    %c0_i32_0 = arith.constant 0 : i32
    return %arg0, %c0_i32 : i32, i32
  }
}

module attributes {stable_mosaic.version = 11 : i64} {
  func.func @residual_block_kernel(%arg0: i32, %arg1: memref<8x32xf32, #tpu.memory_space<vmem>>, %arg2: memref<32x64xf32, #tpu.memory_space<vmem>>, %arg3: memref<1x64xf32, #tpu.memory_space<vmem>>, %arg4: memref<64x32xf32, #tpu.memory_space<vmem>>, %arg5: memref<1x32xf32, #tpu.memory_space<vmem>>, %arg6: memref<1x32xf32, #tpu.memory_space<vmem>>, %arg7: memref<1x32xf32, #tpu.memory_space<vmem>>, %arg8: memref<8x32xf32, #tpu.memory_space<vmem>>) attributes {dimension_semantics = [#tpu.dimension_semantics<parallel>], iteration_bounds = array<i64: 1>, scalar_prefetch = 0 : i64, scratch_operands = 0 : i64, tpu.core_type = #tpu.core_type<tc>, window_params = [{transform_indices = @transform_0, window_bounds = array<i64: 8, 32>}, {pipeline_mode = #tpu.pipeline_mode<synchronous>, transform_indices = @transform_1, window_bounds = array<i64: 32, 64>}, {pipeline_mode = #tpu.pipeline_mode<synchronous>, transform_indices = @transform_2, window_bounds = array<i64: 1, 64>}, {pipeline_mode = #tpu.pipeline_mode<synchronous>, transform_indices = @transform_3, window_bounds = array<i64: 64, 32>}, {pipeline_mode = #tpu.pipeline_mode<synchronous>, transform_indices = @transform_4, window_bounds = array<i64: 1, 32>}, {pipeline_mode = #tpu.pipeline_mode<synchronous>, transform_indices = @transform_5, window_bounds = array<i64: 1, 32>}, {pipeline_mode = #tpu.pipeline_mode<synchronous>, transform_indices = @transform_6, window_bounds = array<i64: 1, 32>}, {transform_indices = @transform_7, window_bounds = array<i64: 8, 32>}]} {
    %c0 = arith.constant 0 : index
    %c0_0 = arith.constant 0 : index
    %0 = vector.load %arg1[%c0, %c0_0] : memref<8x32xf32, #tpu.memory_space<vmem>>, vector<8x32xf32>
    %c0_1 = arith.constant 0 : index
    %c0_2 = arith.constant 0 : index
    %1 = vector.load %arg2[%c0_1, %c0_2] : memref<32x64xf32, #tpu.memory_space<vmem>>, vector<32x64xf32>
    %cst = arith.constant dense<0.000000e+00> : vector<8x64xf32>
    %2 = tpu.matmul %0, %1, %cst {dimension_numbers = #tpu.dot_dimension_numbers<[1], [0], [0], [1], [0, 0, 1, 1], [], []>} : vector<8x32xf32>, vector<32x64xf32>, vector<8x64xf32> -> vector<8x64xf32>
    %c0_3 = arith.constant 0 : index
    %c0_4 = arith.constant 0 : index
    %3 = vector.load %arg3[%c0_3, %c0_4] : memref<1x64xf32, #tpu.memory_space<vmem>>, vector<1x64xf32>
    %4 = vector.broadcast %3 : vector<1x64xf32> to vector<8x64xf32>
    %5 = arith.addf %2, %4 : vector<8x64xf32>
    %cst_5 = arith.constant 0.00999999977 : f32
    %6 = vector.broadcast %cst_5 : f32 to vector<8x64xf32>
    %7 = arith.mulf %6, %5 : vector<8x64xf32>
    %8 = arith.maximumf %5, %7 : vector<8x64xf32>
    %c0_6 = arith.constant 0 : index
    %c0_7 = arith.constant 0 : index
    %9 = vector.load %arg4[%c0_6, %c0_7] : memref<64x32xf32, #tpu.memory_space<vmem>>, vector<64x32xf32>
    %cst_8 = arith.constant dense<0.000000e+00> : vector<8x32xf32>
    %10 = tpu.matmul %8, %9, %cst_8 {dimension_numbers = #tpu.dot_dimension_numbers<[1], [0], [0], [1], [0, 0, 1, 1], [], []>} : vector<8x64xf32>, vector<64x32xf32>, vector<8x32xf32> -> vector<8x32xf32>
    %c0_9 = arith.constant 0 : index
    %c0_10 = arith.constant 0 : index
    %11 = vector.load %arg5[%c0_9, %c0_10] : memref<1x32xf32, #tpu.memory_space<vmem>>, vector<1x32xf32>
    %12 = vector.broadcast %11 : vector<1x32xf32> to vector<8x32xf32>
    %13 = arith.addf %10, %12 : vector<8x32xf32>
    %14 = arith.addf %13, %0 : vector<8x32xf32>
    %cst_11 = arith.constant dense<0.000000e+00> : vector<8xf32>
    %15 = vector.multi_reduction <add>, %14, %cst_11 [1] : vector<8x32xf32> to vector<8xf32>
    %16 = vector.shape_cast %15 : vector<8xf32> to vector<8x1xf32>
    %cst_12 = arith.constant 3.200000e+01 : f32
    %17 = vector.broadcast %cst_12 : f32 to vector<8x1xf32>
    %18 = arith.divf %16, %17 : vector<8x1xf32>
    %19 = vector.broadcast %18 : vector<8x1xf32> to vector<8x32xf32>
    %20 = arith.subf %14, %19 : vector<8x32xf32>
    %21 = arith.mulf %20, %20 : vector<8x32xf32>
    %cst_13 = arith.constant dense<0.000000e+00> : vector<8xf32>
    %22 = vector.multi_reduction <add>, %21, %cst_13 [1] : vector<8x32xf32> to vector<8xf32>
    %23 = vector.shape_cast %22 : vector<8xf32> to vector<8x1xf32>
    %cst_14 = arith.constant 3.200000e+01 : f32
    %24 = vector.broadcast %cst_14 : f32 to vector<8x1xf32>
    %25 = arith.divf %23, %24 : vector<8x1xf32>
    %cst_15 = arith.constant 9.99999974E-6 : f32
    %26 = vector.broadcast %cst_15 : f32 to vector<8x1xf32>
    %27 = arith.addf %25, %26 : vector<8x1xf32>
    %28 = math.rsqrt %27 : vector<8x1xf32>
    %29 = vector.broadcast %28 : vector<8x1xf32> to vector<8x32xf32>
    %30 = arith.mulf %20, %29 : vector<8x32xf32>
    %c0_16 = arith.constant 0 : index
    %c0_17 = arith.constant 0 : index
    %31 = vector.load %arg6[%c0_16, %c0_17] : memref<1x32xf32, #tpu.memory_space<vmem>>, vector<1x32xf32>
    %32 = vector.broadcast %31 : vector<1x32xf32> to vector<8x32xf32>
    %33 = arith.mulf %30, %32 : vector<8x32xf32>
    %c0_18 = arith.constant 0 : index
    %c0_19 = arith.constant 0 : index
    %34 = vector.load %arg7[%c0_18, %c0_19] : memref<1x32xf32, #tpu.memory_space<vmem>>, vector<1x32xf32>
    %35 = vector.broadcast %34 : vector<1x32xf32> to vector<8x32xf32>
    %36 = arith.addf %33, %35 : vector<8x32xf32>
    %cst_20 = arith.constant 0.00999999977 : f32
    %37 = vector.broadcast %cst_20 : f32 to vector<8x32xf32>
    %38 = arith.mulf %37, %36 : vector<8x32xf32>
    %39 = arith.maximumf %36, %38 : vector<8x32xf32>
    %c0_21 = arith.constant 0 : index
    %c0_22 = arith.constant 0 : index
    %40 = vector.load %arg8[%c0_21, %c0_22] : memref<8x32xf32, #tpu.memory_space<vmem>>, vector<8x32xf32>
    tpu.vector_store %arg8[%c0_21, %c0_22], %39 {strides = array<i32>} : memref<8x32xf32, #tpu.memory_space<vmem>>, vector<8x32xf32>,
    return
  }
  func.func @transform_0(%arg0: i32) -> (i32, i32) {
    %c0_i32 = arith.constant 0 : i32
    %c0_i32_0 = arith.constant 0 : i32
    return %arg0, %c0_i32 : i32, i32
  }
  func.func @transform_1(%arg0: i32) -> (i32, i32) {
    %c0_i32 = arith.constant 0 : i32
    %c0_i32_0 = arith.constant 0 : i32
    %c0_i32_1 = arith.constant 0 : i32
    return %c0_i32, %c0_i32_0 : i32, i32
  }
  func.func @transform_2(%arg0: i32) -> (i32, i32) {
    %c0_i32 = arith.constant 0 : i32
    %c0_i32_0 = arith.constant 0 : i32
    %c0_i32_1 = arith.constant 0 : i32
    return %c0_i32, %c0_i32_0 : i32, i32
  }
  func.func @transform_3(%arg0: i32) -> (i32, i32) {
    %c0_i32 = arith.constant 0 : i32
    %c0_i32_0 = arith.constant 0 : i32
    %c0_i32_1 = arith.constant 0 : i32
    return %c0_i32, %c0_i32_0 : i32, i32
  }
  func.func @transform_4(%arg0: i32) -> (i32, i32) {
    %c0_i32 = arith.constant 0 : i32
    %c0_i32_0 = arith.constant 0 : i32
    %c0_i32_1 = arith.constant 0 : i32
    return %c0_i32, %c0_i32_0 : i32, i32
  }
  func.func @transform_5(%arg0: i32) -> (i32, i32) {
    %c0_i32 = arith.constant 0 : i32
    %c0_i32_0 = arith.constant 0 : i32
    %c0_i32_1 = arith.constant 0 : i32
    return %c0_i32, %c0_i32_0 : i32, i32
  }
  func.func @transform_6(%arg0: i32) -> (i32, i32) {
    %c0_i32 = arith.constant 0 : i32
    %c0_i32_0 = arith.constant 0 : i32
    %c0_i32_1 = arith.constant 0 : i32
    return %c0_i32, %c0_i32_0 : i32, i32
  }
  func.func @transform_7(%arg0: i32) -> (i32, i32) {
    %c0_i32 = arith.constant 0 : i32
    %c0_i32_0 = arith.constant 0 : i32
    return %arg0, %c0_i32 : i32, i32
  }
}

</mosaic_0001>

<llo_original>
// kernel: tpu_custom_call.1
$region0: #{tpu_custom_call.1}
  #allocation0 [shape = 'u32[]', space=smem, size = 0x4, offset = 0x4, fixed_abs, tag = 'smem constant byte address 0x4 - core index']
  #allocation1 [shape = 'u32[144,128]{1,0:T(1,128)}', space=vmem, size = 0x12000, scoped, tag = 'internal scratch']
  %s0 = inlined_call_operand.vmem [shape: f32[8,32], index: 0, kind: input, shape index: {}]
  %s1 = inlined_call_operand.vmem [shape: f32[32,64], index: 1, kind: input, shape index: {}]
  %s2 = inlined_call_operand.vmem [shape: f32[1,64], index: 2, kind: input, shape index: {}]
  %s3 = inlined_call_operand.vmem [shape: f32[64,32], index: 3, kind: input, shape index: {}]
  %s4 = inlined_call_operand.vmem [shape: f32[1,32], index: 4, kind: input, shape index: {}]
  %s5 = inlined_call_operand.vmem [shape: f32[1,32], index: 5, kind: input, shape index: {}]
  %s6 = inlined_call_operand.vmem [shape: f32[1,32], index: 6, kind: input, shape index: {}]
  %s7 = inlined_call_operand.hbm [shape: f32[8,32], index: 7, kind: output, shape index: {}]
  %s8 = sld [smem:[#allocation0]]
  $region38: #{tpu_custom_call.1} parent=0
    _
  %s10 = ssub.s32 1, %s8
  %s11 = scalar_select 0, %s10, %s8
  $region1: #{tpu_custom_call.1} parent=0
    #allocation2 [shape = 'u8[4096]{0}', space=vmem, size = 0x1000, scoped, tag = 'output window, operand 0, single buffered']
    #allocation3 [shape = 's32[1]{0}', space=sflag, size = 0x4, scoped, tag = 'scoped memory for tpu_custom_call.1']
    %12 = vsyncpa [#allocation3], 0
    // Predicated region
    $region2: #{tpu_custom_call.1} parent=1 // pred_check
      _
    $region3: #{tpu_custom_call.1} parent=1 // pred_check_branch
      %14 = sbr.rel (0) target = $region5
    $region4: #{tpu_custom_call.1} parent=1 // pred_region
      _
    $region5: #{tpu_custom_call.1} parent=1 // pred_fallthru
      _
    // Predicated region
    $region6: #{tpu_custom_call.1} parent=1 // pred_check
      _
    $region7: #{tpu_custom_call.1} parent=1 // pred_check_branch
      %16 = sbr.rel (0) target = $region9
    $region8: #{tpu_custom_call.1} parent=1 // pred_region
      _
    $region9: #{tpu_custom_call.1} parent=1 // pred_fallthru
      _
    // Predicated region
    $region10: #{tpu_custom_call.1} parent=1 // pred_check
      _
    $region11: #{tpu_custom_call.1} parent=1 // pred_check_branch
      %18 = sbr.rel (0) target = $region13
    $region12: #{tpu_custom_call.1} parent=1 // pred_region
      _
    $region13: #{tpu_custom_call.1} parent=1 // pred_fallthru
      _
    // Predicated region
    $region14: #{tpu_custom_call.1} parent=1 // pred_check
      _
    $region15: #{tpu_custom_call.1} parent=1 // pred_check_branch
      %20 = sbr.rel (0) target = $region17
    $region16: #{tpu_custom_call.1} parent=1 // pred_region
      _
    $region17: #{tpu_custom_call.1} parent=1 // pred_fallthru
      _
    // Predicated region
    $region18: #{tpu_custom_call.1} parent=1 // pred_check
      _
    $region19: #{tpu_custom_call.1} parent=1 // pred_check_branch
      %22 = sbr.rel (0) target = $region21
    $region20: #{tpu_custom_call.1} parent=1 // pred_region
      _
    $region21: #{tpu_custom_call.1} parent=1 // pred_fallthru
      _
    // Predicated region
    $region22: #{tpu_custom_call.1} parent=1 // pred_check
      _
    $region23: #{tpu_custom_call.1} parent=1 // pred_check_branch
      %24 = sbr.rel (0) target = $region25
    $region24: #{tpu_custom_call.1} parent=1 // pred_region
      _
    $region25: #{tpu_custom_call.1} parent=1 // pred_fallthru
      _
    // Predicated region
    $region26: #{tpu_custom_call.1} parent=1 // pred_check
      _
    $region27: #{tpu_custom_call.1} parent=1 // pred_check_branch
      %26 = sbr.rel (0) target = $region29
    $region28: #{tpu_custom_call.1} parent=1 // pred_region
      _
    $region29: #{tpu_custom_call.1} parent=1 // pred_fallthru
      _
    %v27 = vld [vmem:[%s0] sm:$0xff]
    %v28 = vld [vmem:[%s1] sm:$0xff]
    %v29 = vld [vmem:[%s1 + $0x8] sm:$0xff]
    %v30 = vld [vmem:[%s1 + $0x10] sm:$0xff]
    %v31 = vld [vmem:[%s1 + $0x18] sm:$0xff]
    %v32 = vld [vmem:[%s2] sm:$0x1]
    %v34 = vlaneseq
    %v35 = vshrl.u32 %v34, 7
    %v36 = vsub.s32 0, %v35
    %v37 = vrot.slane %v32, %v36
    %vm39 = vcmask 261120
    %v41 = vsel %vm39, %v27, 0
    %43 = vmatprep.subr.mxu0 0.0
    %44 = vmatpush1.msra.mxu0 %v28
    %45 = vmatprep.subr.mxu0 0.0
    %46 = vmatpush1.msra.mxu0 %v29
    %47 = vmatprep.subr.mxu0 0.0
    %48 = vmatpush1.msra.mxu0 %v30
    %49 = vmatprep.subr.mxu0 0.0
    %50 = vmatpush1.msra.mxu0 %v31
    %51 = vmatprep.subr.mxu0 0.0
    %52 = vmatpush1.msra.mxu0 0.0
    %53 = vmatprep.subr.mxu0 0.0
    %54 = vmatpush1.msra.mxu0 0.0
    %55 = vmatprep.subr.mxu0 0.0
    %56 = vmatpush1.msra.mxu0 0.0
    %57 = vmatprep.subr.mxu0 0.0
    %58 = vmatpush1.msra.mxu0 0.0
    %59 = vmatprep.subr.mxu0 0.0
    %60 = vmatpush1.msra.mxu0 0.0
    %61 = vmatprep.subr.mxu0 0.0
    %62 = vmatpush1.msra.mxu0 0.0
    %63 = vmatprep.subr.mxu0 0.0
    %64 = vmatpush1.msra.mxu0 0.0
    %65 = vmatprep.subr.mxu0 0.0
    %66 = vmatpush1.msra.mxu0 0.0
    %67 = vmatprep.subr.mxu0 0.0
    %68 = vmatpush1.msra.mxu0 0.0
    %69 = vmatprep.subr.mxu0 0.0
    %70 = vmatpush1.msra.mxu0 0.0
    %71 = vmatprep.subr.mxu0 0.0
    %72 = vmatpush1.msra.mxu0 0.0
    %73 = vmatprep.subr.mxu0 0.0
    %74 = vmatpush1.msra.mxu0 0.0
    %75 = vmatprep.subr.mxu0 0.0
    %76 = vmatpush1.msra.mxu0 0.0
    %77 = vmatprep.subr.mxu0 0.0
    %78 = vmatpush1.msra.mxu0 0.0
    %79 = vmatprep.subr.mxu0 0.0
    %80 = vmatpush1.msra.mxu0 0.0
    %81 = vmatprep.subr.mxu0 0.0
    %82 = vmatpush1.msra.mxu0 0.0
    %83 = vmatprep.subr.mxu0 0.0
    %84 = vmatpush1.msra.mxu0 0.0
    %85 = vmatprep.subr.mxu0 0.0
    %86 = vmatpush1.msra.mxu0 0.0
    %87 = vmatprep.subr.mxu0 0.0
    %88 = vmatpush1.msra.mxu0 0.0
    %89 = vmatprep.subr.mxu0 0.0
    %90 = vmatpush1.msra.mxu0 0.0
    %91 = vmatprep.subr.mxu0 0.0
    %92 = vmatpush1.msra.mxu0 0.0
    %93 = vmatprep.subr.mxu0 0.0
    %94 = vmatpush1.msra.mxu0 0.0
    %95 = vmatprep.subr.mxu0 0.0
    %96 = vmatpush1.msra.mxu0 0.0
    %97 = vmatprep.subr.mxu0 0.0
    %98 = vmatpush1.msra.mxu0 0.0
    %99 = vmatprep.subr.mxu0 0.0
    %100 = vmatpush1.msra.mxu0 0.0
    %101 = vmatprep.subr.mxu0 0.0
    %102 = vmatpush1.msra.mxu0 0.0
    %103 = vmatprep.subr.mxu0 0.0
    %104 = vmatpush1.msra.mxu0 0.0
    %105 = vmatprep.subr.mxu0 0.0
    %106 = vmatpush1.msra.mxu0 0.0
    %107 = vmatprep.mubr.f32.mxu0 0.0
    %108 = vmatmul.mubr.f32.gmra.mrb[0].mxu0 %v41
    %v109 = vpop.f32.mrb[0].mxu0
    %v110 = vadd.f32 %v37, %v109
    %v111 = vpop.f32.mrb[0].mxu0
    %112 = vdwg.mxu0
    %v113 = vmul.f32 %v110, 0.01
    %v114 = vmax.f32 %v110, %v113
    %v115 = vld [vmem:[%s3] sm:$0xff]
    %v116 = vld [vmem:[%s3 + $0x8] sm:$0xff]
    %v117 = vld [vmem:[%s3 + $0x10] sm:$0xff]
    %v118 = vld [vmem:[%s3 + $0x18] sm:$0xff]
    %v119 = vld [vmem:[%s3 + $0x20] sm:$0xff]
    %v120 = vld [vmem:[%s3 + $0x28] sm:$0xff]
    %v121 = vld [vmem:[%s3 + $0x30] sm:$0xff]
    %v122 = vld [vmem:[%s3 + $0x38] sm:$0xff]
    %v123 = vld [vmem:[%s4] sm:$0x1]
    %v125 = vlaneseq
    %v126 = vshrl.u32 %v125, 7
    %v127 = vsub.s32 0, %v126
    %v128 = vrot.slane %v123, %v127
    %vm130 = vcmask 523264
    %v132 = vsel %vm130, %v114, 0
    %134 = vmatprep.subr.mxu0 0.0
    %135 = vmatpush1.msra.mxu0 %v115
    %136 = vmatprep.subr.mxu0 0.0
    %137 = vmatpush1.msra.mxu0 %v116
    %138 = vmatprep.subr.mxu0 0.0
    %139 = vmatpush1.msra.mxu0 %v117
    %140 = vmatprep.subr.mxu0 0.0
    %141 = vmatpush1.msra.mxu0 %v118
    %142 = vmatprep.subr.mxu0 0.0
    %143 = vmatpush1.msra.mxu0 %v119
    %144 = vmatprep.subr.mxu0 0.0
    %145 = vmatpush1.msra.mxu0 %v120
    %146 = vmatprep.subr.mxu0 0.0
    %147 = vmatpush1.msra.mxu0 %v121
    %148 = vmatprep.subr.mxu0 0.0
    %149 = vmatpush1.msra.mxu0 %v122
    %150 = vmatprep.subr.mxu0 0.0
    %151 = vmatpush1.msra.mxu0 0.0
    %152 = vmatprep.subr.mxu0 0.0
    %153 = vmatpush1.msra.mxu0 0.0
    %154 = vmatprep.subr.mxu0 0.0
    %155 = vmatpush1.msra.mxu0 0.0
    %156 = vmatprep.subr.mxu0 0.0
    %157 = vmatpush1.msra.mxu0 0.0
    %158 = vmatprep.subr.mxu0 0.0
    %159 = vmatpush1.msra.mxu0 0.0
    %160 = vmatprep.subr.mxu0 0.0
    %161 = vmatpush1.msra.mxu0 0.0
    %162 = vmatprep.subr.mxu0 0.0
    %163 = vmatpush1.msra.mxu0 0.0
    %164 = vmatprep.subr.mxu0 0.0
    %165 = vmatpush1.msra.mxu0 0.0
    %166 = vmatprep.subr.mxu0 0.0
    %167 = vmatpush1.msra.mxu0 0.0
    %168 = vmatprep.subr.mxu0 0.0
    %169 = vmatpush1.msra.mxu0 0.0
    %170 = vmatprep.subr.mxu0 0.0
    %171 = vmatpush1.msra.mxu0 0.0
    %172 = vmatprep.subr.mxu0 0.0
    %173 = vmatpush1.msra.mxu0 0.0
    %174 = vmatprep.subr.mxu0 0.0
    %175 = vmatpush1.msra.mxu0 0.0
    %176 = vmatprep.subr.mxu0 0.0
    %177 = vmatpush1.msra.mxu0 0.0
    %178 = vmatprep.subr.mxu0 0.0
    %179 = vmatpush1.msra.mxu0 0.0
    %180 = vmatprep.subr.mxu0 0.0
    %181 = vmatpush1.msra.mxu0 0.0
    %182 = vmatprep.subr.mxu0 0.0
    %183 = vmatpush1.msra.mxu0 0.0
    %184 = vmatprep.subr.mxu0 0.0
    %185 = vmatpush1.msra.mxu0 0.0
    %186 = vmatprep.subr.mxu0 0.0
    %187 = vmatpush1.msra.mxu0 0.0
    %188 = vmatprep.subr.mxu0 0.0
    %189 = vmatpush1.msra.mxu0 0.0
    %190 = vmatprep.subr.mxu0 0.0
    %191 = vmatpush1.msra.mxu0 0.0
    %192 = vmatprep.subr.mxu0 0.0
    %193 = vmatpush1.msra.mxu0 0.0
    %194 = vmatprep.subr.mxu0 0.0
    %195 = vmatpush1.msra.mxu0 0.0
    %196 = vmatprep.subr.mxu0 0.0
    %197 = vmatpush1.msra.mxu0 0.0
    %198 = vmatprep.mubr.f32.mxu0 0.0
    %199 = vmatmul.mubr.f32.gmra.mrb[0].mxu0 %v132
    %v200 = vpop.f32.mrb[0].mxu0
    %v201 = vadd.f32 %v128, %v200
    %v202 = vpop.f32.mrb[0].mxu0
    %203 = vdwg.mxu0
    %v204 = vadd.f32 %v201, %v27
    %v205 = vsel %vm39, %v204, 0.0
    %206 = vadd.xlane.f32.xlu0 %v205
    %v207 = vpop.xlane.xlu0 %206
    %v208 = vrcp.pop 32.0
    %v209 = vmul.f32 %v207, %v208
    %v210 = vsub.f32 %v204, %v209
    %v211 = vmul.f32 %v210, %v210
    %v212 = vsel %vm39, %v211, 0.0
    %213 = vadd.xlane.f32.xlu0 %v212
    %v214 = vpop.xlane.xlu0 %213
    %v215 = vmul.f32 %v214, %v208
    %v216 = vadd.f32 %v215, 1e-05
    %v217 = vrsqrt.pop %v216
    %v218 = vmul.f32 %v210, %v217
    %v219 = vld [vmem:[%s5] sm:$0x1]
    %v221 = vlaneseq
    %v222 = vshrl.u32 %v221, 7
    %v223 = vsub.s32 0, %v222
    %v224 = vrot.slane %v219, %v223
    %v226 = vmul.f32 %v218, %v224
    %v227 = vld [vmem:[%s6] sm:$0x1]
    %v229 = vlaneseq
    %v230 = vshrl.u32 %v229, 7
    %v231 = vsub.s32 0, %v230
    %v232 = vrot.slane %v227, %v231
    %v234 = vadd.f32 %v226, %v232
    %v235 = vmul.f32 %v234, 0.01
    %v236 = vmax.f32 %v234, %v235
    %237 = vst.msk [vmem:[#allocation2] sm:$0xff] %vm39, %v236
    // Predicated region
    $region30: #{tpu_custom_call.1} parent=1 // pred_check
      _
    $region31: #{tpu_custom_call.1} parent=1 // pred_check_branch
      %239 = sbr.rel (0) target = $region33
    $region32: #{tpu_custom_call.1} parent=1 // pred_region
      %s241 = ssub.s32 128, 128
      %242 = vsyncadd [#allocation3], %s241
      %s244 = sshll.u32 [#allocation2], 4
      %s245 = int_to_ptr.vmem [resolvable:$true] %s244
      %247 = dma.vmem_to_hbm [thread:$0]  %s245, 128, %s7, [#allocation3]
    $region33: #{tpu_custom_call.1} parent=1 // pred_fallthru
      _
    // Predicated region
    $region34: #{tpu_custom_call.1} parent=1 // pred_check
      _
    $region35: #{tpu_custom_call.1} parent=1 // pred_check_branch
      %249 = sbr.rel (0) target = $region37
    $region36: #{tpu_custom_call.1} parent=1 // pred_region
      %250 = dma.done [#allocation3], 128
    $region37: #{tpu_custom_call.1} parent=1 // pred_fallthru
      _
    %251 = vsyncpa [#allocation3], 1

// kernel: tpu_custom_call.1
$region0: #{tpu_custom_call.1}
  #allocation0 [shape = 'u32[]', space=smem, size = 0x4, offset = 0x4, fixed_abs, tag = 'smem constant byte address 0x4 - core index']
  #allocation1 [shape = 'u32[144,128]{1,0:T(1,128)}', space=vmem, size = 0x12000, scoped, tag = 'internal scratch']
  %s0 = inlined_call_operand.vmem [shape: f32[8,32], index: 0, kind: input, shape index: {}]
  %s1 = inlined_call_operand.vmem [shape: f32[32,64], index: 1, kind: input, shape index: {}]
  %s2 = inlined_call_operand.vmem [shape: f32[1,64], index: 2, kind: input, shape index: {}]
  %s3 = inlined_call_operand.vmem [shape: f32[64,32], index: 3, kind: input, shape index: {}]
  %s4 = inlined_call_operand.vmem [shape: f32[1,32], index: 4, kind: input, shape index: {}]
  %s5 = inlined_call_operand.vmem [shape: f32[1,32], index: 5, kind: input, shape index: {}]
  %s6 = inlined_call_operand.vmem [shape: f32[1,32], index: 6, kind: input, shape index: {}]
  %s7 = inlined_call_operand.hbm [shape: f32[8,32], index: 7, kind: output, shape index: {}]
  %s8 = sld [smem:[#allocation0]]
  $region38: #{tpu_custom_call.1} parent=0
    _
  %s10 = ssub.s32 1, %s8
  %s11 = scalar_select 0, %s10, %s8
  $region1: #{tpu_custom_call.1} parent=0
    #allocation2 [shape = 'u8[4096]{0}', space=vmem, size = 0x1000, scoped, tag = 'output window, operand 0, single buffered']
    #allocation3 [shape = 's32[1]{0}', space=sflag, size = 0x4, scoped, tag = 'scoped memory for tpu_custom_call.1']
    %12 = vsyncpa [#allocation3], 0
    // Predicated region
    $region2: #{tpu_custom_call.1} parent=1 // pred_check
      _
    $region3: #{tpu_custom_call.1} parent=1 // pred_check_branch
      %14 = sbr.rel (0) target = $region5
    $region4: #{tpu_custom_call.1} parent=1 // pred_region
      _
    $region5: #{tpu_custom_call.1} parent=1 // pred_fallthru
      _
    // Predicated region
    $region6: #{tpu_custom_call.1} parent=1 // pred_check
      _
    $region7: #{tpu_custom_call.1} parent=1 // pred_check_branch
      %16 = sbr.rel (0) target = $region9
    $region8: #{tpu_custom_call.1} parent=1 // pred_region
      _
    $region9: #{tpu_custom_call.1} parent=1 // pred_fallthru
      _
    // Predicated region
    $region10: #{tpu_custom_call.1} parent=1 // pred_check
      _
    $region11: #{tpu_custom_call.1} parent=1 // pred_check_branch
      %18 = sbr.rel (0) target = $region13
    $region12: #{tpu_custom_call.1} parent=1 // pred_region
      _
    $region13: #{tpu_custom_call.1} parent=1 // pred_fallthru
      _
    // Predicated region
    $region14: #{tpu_custom_call.1} parent=1 // pred_check
      _
    $region15: #{tpu_custom_call.1} parent=1 // pred_check_branch
      %20 = sbr.rel (0) target = $region17
    $region16: #{tpu_custom_call.1} parent=1 // pred_region
      _
    $region17: #{tpu_custom_call.1} parent=1 // pred_fallthru
      _
    // Predicated region
    $region18: #{tpu_custom_call.1} parent=1 // pred_check
      _
    $region19: #{tpu_custom_call.1} parent=1 // pred_check_branch
      %22 = sbr.rel (0) target = $region21
    $region20: #{tpu_custom_call.1} parent=1 // pred_region
      _
    $region21: #{tpu_custom_call.1} parent=1 // pred_fallthru
      _
    // Predicated region
    $region22: #{tpu_custom_call.1} parent=1 // pred_check
      _
    $region23: #{tpu_custom_call.1} parent=1 // pred_check_branch
      %24 = sbr.rel (0) target = $region25
    $region24: #{tpu_custom_call.1} parent=1 // pred_region
      _
    $region25: #{tpu_custom_call.1} parent=1 // pred_fallthru
      _
    // Predicated region
    $region26: #{tpu_custom_call.1} parent=1 // pred_check
      _
    $region27: #{tpu_custom_call.1} parent=1 // pred_check_branch
      %26 = sbr.rel (0) target = $region29
    $region28: #{tpu_custom_call.1} parent=1 // pred_region
      _
    $region29: #{tpu_custom_call.1} parent=1 // pred_fallthru
      _
    %v27 = vld [vmem:[%s0] sm:$0xff]
    %v28 = vld [vmem:[%s1] sm:$0xff]
    %v29 = vld [vmem:[%s1 + $0x8] sm:$0xff]
    %v30 = vld [vmem:[%s1 + $0x10] sm:$0xff]
    %v31 = vld [vmem:[%s1 + $0x18] sm:$0xff]
    %v32 = vld [vmem:[%s2] sm:$0x1]
    %v34 = vlaneseq
    %v35 = vshrl.u32 %v34, 7
    %v36 = vsub.s32 0, %v35
    %v37 = vrot.slane %v32, %v36
    %vm39 = vcmask 261120
    %v41 = vsel %vm39, %v27, 0
    %43 = vmatprep.subr.mxu0 0.0
    %44 = vmatpush1.msra.mxu0 %v28
    %45 = vmatprep.subr.mxu0 0.0
    %46 = vmatpush1.msra.mxu0 %v29
    %47 = vmatprep.subr.mxu0 0.0
    %48 = vmatpush1.msra.mxu0 %v30
    %49 = vmatprep.subr.mxu0 0.0
    %50 = vmatpush1.msra.mxu0 %v31
    %51 = vmatprep.subr.mxu0 0.0
    %52 = vmatpush1.msra.mxu0 0.0
    %53 = vmatprep.subr.mxu0 0.0
    %54 = vmatpush1.msra.mxu0 0.0
    %55 = vmatprep.subr.mxu0 0.0
    %56 = vmatpush1.msra.mxu0 0.0
    %57 = vmatprep.subr.mxu0 0.0
    %58 = vmatpush1.msra.mxu0 0.0
    %59 = vmatprep.subr.mxu0 0.0
    %60 = vmatpush1.msra.mxu0 0.0
    %61 = vmatprep.subr.mxu0 0.0
    %62 = vmatpush1.msra.mxu0 0.0
    %63 = vmatprep.subr.mxu0 0.0
    %64 = vmatpush1.msra.mxu0 0.0
    %65 = vmatprep.subr.mxu0 0.0
    %66 = vmatpush1.msra.mxu0 0.0
    %67 = vmatprep.subr.mxu0 0.0
    %68 = vmatpush1.msra.mxu0 0.0
    %69 = vmatprep.subr.mxu0 0.0
    %70 = vmatpush1.msra.mxu0 0.0
    %71 = vmatprep.subr.mxu0 0.0
    %72 = vmatpush1.msra.mxu0 0.0
    %73 = vmatprep.subr.mxu0 0.0
    %74 = vmatpush1.msra.mxu0 0.0
    %75 = vmatprep.subr.mxu0 0.0
    %76 = vmatpush1.msra.mxu0 0.0
    %77 = vmatprep.subr.mxu0 0.0
    %78 = vmatpush1.msra.mxu0 0.0
    %79 = vmatprep.subr.mxu0 0.0
    %80 = vmatpush1.msra.mxu0 0.0
    %81 = vmatprep.subr.mxu0 0.0
    %82 = vmatpush1.msra.mxu0 0.0
    %83 = vmatprep.subr.mxu0 0.0
    %84 = vmatpush1.msra.mxu0 0.0
    %85 = vmatprep.subr.mxu0 0.0
    %86 = vmatpush1.msra.mxu0 0.0
    %87 = vmatprep.subr.mxu0 0.0
    %88 = vmatpush1.msra.mxu0 0.0
    %89 = vmatprep.subr.mxu0 0.0
    %90 = vmatpush1.msra.mxu0 0.0
    %91 = vmatprep.subr.mxu0 0.0
    %92 = vmatpush1.msra.mxu0 0.0
    %93 = vmatprep.subr.mxu0 0.0
    %94 = vmatpush1.msra.mxu0 0.0
    %95 = vmatprep.subr.mxu0 0.0
    %96 = vmatpush1.msra.mxu0 0.0
    %97 = vmatprep.subr.mxu0 0.0
    %98 = vmatpush1.msra.mxu0 0.0
    %99 = vmatprep.subr.mxu0 0.0
    %100 = vmatpush1.msra.mxu0 0.0
    %101 = vmatprep.subr.mxu0 0.0
    %102 = vmatpush1.msra.mxu0 0.0
    %103 = vmatprep.subr.mxu0 0.0
    %104 = vmatpush1.msra.mxu0 0.0
    %105 = vmatprep.subr.mxu0 0.0
    %106 = vmatpush1.msra.mxu0 0.0
    %107 = vmatprep.mubr.f32.mxu0 0.0
    %108 = vmatmul.mubr.f32.gmra.mrb[0].mxu0 %v41
    %v109 = vpop.f32.mrb[0].mxu0
    %v110 = vadd.f32 %v37, %v109
    %v111 = vpop.f32.mrb[0].mxu0
    %112 = vdwg.mxu0
    %v113 = vmul.f32 %v110, 0.01
    %v114 = vmax.f32 %v110, %v113
    %v115 = vld [vmem:[%s3] sm:$0xff]
    %v116 = vld [vmem:[%s3 + $0x8] sm:$0xff]
    %v117 = vld [vmem:[%s3 + $0x10] sm:$0xff]
    %v118 = vld [vmem:[%s3 + $0x18] sm:$0xff]
    %v119 = vld [vmem:[%s3 + $0x20] sm:$0xff]
    %v120 = vld [vmem:[%s3 + $0x28] sm:$0xff]
    %v121 = vld [vmem:[%s3 + $0x30] sm:$0xff]
    %v122 = vld [vmem:[%s3 + $0x38] sm:$0xff]
    %v123 = vld [vmem:[%s4] sm:$0x1]
    %v125 = vlaneseq
    %v126 = vshrl.u32 %v125, 7
    %v127 = vsub.s32 0, %v126
    %v128 = vrot.slane %v123, %v127
    %vm130 = vcmask 523264
    %v132 = vsel %vm130, %v114, 0
    %134 = vmatprep.subr.mxu0 0.0
    %135 = vmatpush1.msra.mxu0 %v115
    %136 = vmatprep.subr.mxu0 0.0
    %137 = vmatpush1.msra.mxu0 %v116
    %138 = vmatprep.subr.mxu0 0.0
    %139 = vmatpush1.msra.mxu0 %v117
    %140 = vmatprep.subr.mxu0 0.0
    %141 = vmatpush1.msra.mxu0 %v118
    %142 = vmatprep.subr.mxu0 0.0
    %143 = vmatpush1.msra.mxu0 %v119
    %144 = vmatprep.subr.mxu0 0.0
    %145 = vmatpush1.msra.mxu0 %v120
    %146 = vmatprep.subr.mxu0 0.0
    %147 = vmatpush1.msra.mxu0 %v121
    %148 = vmatprep.subr.mxu0 0.0
    %149 = vmatpush1.msra.mxu0 %v122
    %150 = vmatprep.subr.mxu0 0.0
    %151 = vmatpush1.msra.mxu0 0.0
    %152 = vmatprep.subr.mxu0 0.0
    %153 = vmatpush1.msra.mxu0 0.0
    %154 = vmatprep.subr.mxu0 0.0
    %155 = vmatpush1.msra.mxu0 0.0
    %156 = vmatprep.subr.mxu0 0.0
    %157 = vmatpush1.msra.mxu0 0.0
    %158 = vmatprep.subr.mxu0 0.0
    %159 = vmatpush1.msra.mxu0 0.0
    %160 = vmatprep.subr.mxu0 0.0
    %161 = vmatpush1.msra.mxu0 0.0
    %162 = vmatprep.subr.mxu0 0.0
    %163 = vmatpush1.msra.mxu0 0.0
    %164 = vmatprep.subr.mxu0 0.0
    %165 = vmatpush1.msra.mxu0 0.0
    %166 = vmatprep.subr.mxu0 0.0
    %167 = vmatpush1.msra.mxu0 0.0
    %168 = vmatprep.subr.mxu0 0.0
    %169 = vmatpush1.msra.mxu0 0.0
    %170 = vmatprep.subr.mxu0 0.0
    %171 = vmatpush1.msra.mxu0 0.0
    %172 = vmatprep.subr.mxu0 0.0
    %173 = vmatpush1.msra.mxu0 0.0
    %174 = vmatprep.subr.mxu0 0.0
    %175 = vmatpush1.msra.mxu0 0.0
    %176 = vmatprep.subr.mxu0 0.0
    %177 = vmatpush1.msra.mxu0 0.0
    %178 = vmatprep.subr.mxu0 0.0
    %179 = vmatpush1.msra.mxu0 0.0
    %180 = vmatprep.subr.mxu0 0.0
    %181 = vmatpush1.msra.mxu0 0.0
    %182 = vmatprep.subr.mxu0 0.0
    %183 = vmatpush1.msra.mxu0 0.0
    %184 = vmatprep.subr.mxu0 0.0
    %185 = vmatpush1.msra.mxu0 0.0
    %186 = vmatprep.subr.mxu0 0.0
    %187 = vmatpush1.msra.mxu0 0.0
    %188 = vmatprep.subr.mxu0 0.0
    %189 = vmatpush1.msra.mxu0 0.0
    %190 = vmatprep.subr.mxu0 0.0
    %191 = vmatpush1.msra.mxu0 0.0
    %192 = vmatprep.subr.mxu0 0.0
    %193 = vmatpush1.msra.mxu0 0.0
    %194 = vmatprep.subr.mxu0 0.0
    %195 = vmatpush1.msra.mxu0 0.0
    %196 = vmatprep.subr.mxu0 0.0
    %197 = vmatpush1.msra.mxu0 0.0
    %198 = vmatprep.mubr.f32.mxu0 0.0
    %199 = vmatmul.mubr.f32.gmra.mrb[0].mxu0 %v132
    %v200 = vpop.f32.mrb[0].mxu0
    %v201 = vadd.f32 %v128, %v200
    %v202 = vpop.f32.mrb[0].mxu0
    %203 = vdwg.mxu0
    %v204 = vadd.f32 %v201, %v27
    %v205 = vsel %vm39, %v204, 0.0
    %206 = vadd.xlane.f32.xlu0 %v205
    %v207 = vpop.xlane.xlu0 %206
    %v208 = vrcp.pop 32.0
    %v209 = vmul.f32 %v207, %v208
    %v210 = vsub.f32 %v204, %v209
    %v211 = vmul.f32 %v210, %v210
    %v212 = vsel %vm39, %v211, 0.0
    %213 = vadd.xlane.f32.xlu0 %v212
    %v214 = vpop.xlane.xlu0 %213
    %v215 = vmul.f32 %v214, %v208
    %v216 = vadd.f32 %v215, 1e-05
    %v217 = vrsqrt.pop %v216
    %v218 = vmul.f32 %v210, %v217
    %v219 = vld [vmem:[%s5] sm:$0x1]
    %v221 = vlaneseq
    %v222 = vshrl.u32 %v221, 7
    %v223 = vsub.s32 0, %v222
    %v224 = vrot.slane %v219, %v223
    %v226 = vmul.f32 %v218, %v224
    %v227 = vld [vmem:[%s6] sm:$0x1]
    %v229 = vlaneseq
    %v230 = vshrl.u32 %v229, 7
    %v231 = vsub.s32 0, %v230
    %v232 = vrot.slane %v227, %v231
    %v234 = vadd.f32 %v226, %v232
    %v235 = vmul.f32 %v234, 0.01
    %v236 = vmax.f32 %v234, %v235
    %237 = vst.msk [vmem:[#allocation2] sm:$0xff] %vm39, %v236
    // Predicated region
    $region30: #{tpu_custom_call.1} parent=1 // pred_check
      _
    $region31: #{tpu_custom_call.1} parent=1 // pred_check_branch
      %239 = sbr.rel (0) target = $region33
    $region32: #{tpu_custom_call.1} parent=1 // pred_region
      %s241 = ssub.s32 128, 128
      %242 = vsyncadd [#allocation3], %s241
      %s244 = sshll.u32 [#allocation2], 4
      %s245 = int_to_ptr.vmem [resolvable:$true] %s244
      %247 = dma.vmem_to_hbm [thread:$0]  %s245, 128, %s7, [#allocation3]
    $region33: #{tpu_custom_call.1} parent=1 // pred_fallthru
      _
    // Predicated region
    $region34: #{tpu_custom_call.1} parent=1 // pred_check
      _
    $region35: #{tpu_custom_call.1} parent=1 // pred_check_branch
      %249 = sbr.rel (0) target = $region37
    $region36: #{tpu_custom_call.1} parent=1 // pred_region
      %250 = dma.done [#allocation3], 128
    $region37: #{tpu_custom_call.1} parent=1 // pred_fallthru
      _
    %251 = vsyncpa [#allocation3], 1

</llo_original>
